<compile_context>
chip_gen: v5e
topology: v5e:2x2
jax: 0.10.0
libtpu: 0.0.40
codegen_flags: <defaults>
</compile_context>

<pallas_src>
import functools

import numpy as np
import jax
import jax.numpy as jnp
from jax.experimental import pallas as pl
from jax.experimental.pallas import tpu as pltpu

BN_EPS = 1e-5
LANE = 128
SUBLANE = 8


def _round_up(n, m):
    return ((n + m - 1) // m) * m


def baseline_fc_kernel(sketch_ref, image_ref, wh_ref, bh_ref, whead_ref,
                       bhead_ref, hash_ref, head_ref, xbuf):
    """Single grid-less invocation; everything VMEM-resident.

    sketch_ref, image_ref : [B, 2048] f32
    wh_ref    : [H, 2048]   bf16  (fc_hash weight, BN folded, dense orientation)
    bh_ref    : [1, H]      f32   (fc_hash bias, BN folded)
    whead_ref : [H, Nhead]  bf16  (columns = [kd(K) | cls(C) | zero pad])
    bhead_ref : [1, Nhead]  f32
    hash_ref  : [rows, H]     f32 out
    head_ref  : [rows, Nhead] f32 out
    xbuf      : [rows, 2048]  bf16 scratch (stacked, zero-padded LHS)
    """
    b = sketch_ref.shape[0]

    # Stack sketch | image into one sublane-dense bf16 LHS; pad rows are zero.
    xbuf[...] = jnp.zeros(xbuf.shape, xbuf.dtype)
    xbuf[0:b, :] = sketch_ref[...].astype(jnp.bfloat16)
    xbuf[b:2 * b, :] = image_ref[...].astype(jnp.bfloat16)

    # fc_hash with inference BatchNorm pre-folded (host-side, once):
    #   [rows, 2048] x [H, 2048]^T  -- bf16 operands, f32 MXU accumulation,
    #   bias added on the f32 accumulator (native VPU path on all generations).
    h = jnp.dot(xbuf[...], wh_ref[...].T,
                preferred_element_type=jnp.float32) + bh_ref[...]
    hash_ref[...] = h

    # Fused fc_kd | fc_cls head: [rows, H] x [H, Nhead] (contraction = real H).
    head_ref[...] = jnp.dot(h.astype(jnp.bfloat16), whead_ref[...],
                            preferred_element_type=jnp.float32) + bhead_ref[...]


def prepare_params(params):
    """One-time host-side prep: BN fold, bf16 cast, dense layouts, cls|kd fuse."""
    w_hash = jnp.asarray(params["w_hash"], jnp.float32)      # [H, 2048]
    b_hash = jnp.asarray(params["b_hash"], jnp.float32)      # [H]
    gamma = jnp.asarray(params["bn_gamma"], jnp.float32)
    beta = jnp.asarray(params["bn_beta"], jnp.float32)
    mean = jnp.asarray(params["bn_mean"], jnp.float32)
    var = jnp.asarray(params["bn_var"], jnp.float32)
    w_cls = jnp.asarray(params["w_cls"], jnp.float32)         # [C, H]
    b_cls = jnp.asarray(params["b_cls"], jnp.float32)         # [C]
    w_kd = jnp.asarray(params["w_kd"], jnp.float32)           # [K, H]
    b_kd = jnp.asarray(params["b_kd"], jnp.float32)           # [K]

    H, _ = w_hash.shape
    C = w_cls.shape[0]
    K = w_kd.shape[0]
    n_head = _round_up(K + C, LANE)                            # 1000+16 -> 1024

    # Fold inference BatchNorm into fc_hash; keep the dense [H, 2048] layout.
    scale = gamma * jax.lax.rsqrt(var + BN_EPS)                # [H]
    wh = (w_hash * scale[:, None]).astype(jnp.bfloat16)        # [H, 2048] bf16
    bh = ((b_hash - mean) * scale + beta).reshape(1, H)        # [1, H] f32

    # Fused head weight: columns [0:K] = kd, [K:K+C] = cls, rest zero.
    whead = jnp.zeros((H, n_head), jnp.float32)
    whead = whead.at[:, :K].set(w_kd.T)
    whead = whead.at[:, K:K + C].set(w_cls.T)
    whead = whead.astype(jnp.bfloat16)                          # [H, n_head] bf16
    bhead = jnp.zeros((1, n_head), jnp.float32)
    bhead = bhead.at[0, :K].set(b_kd)
    bhead = bhead.at[0, K:K + C].set(b_cls)                     # f32

    return dict(wh=wh, bh=bh, whead=whead, bhead=bhead, H=H, C=C, K=K)


@functools.partial(jax.jit, static_argnames=("H", "C", "K"))
def _baseline_fc_impl(sketch, image, wh, bh, whead, bhead, *, H, C, K):
    B, D = sketch.shape
    rows = _round_up(2 * B, SUBLANE)            # pad batch rows to a full tile
    n_head = whead.shape[1]
    vmem = pl.BlockSpec(memory_space=pltpu.MemorySpace.VMEM)

    hash_slab, head_slab = pl.pallas_call(
        baseline_fc_kernel,
        out_shape=(
            jax.ShapeDtypeStruct((rows, H), jnp.float32),       # sketch|image hash
            jax.ShapeDtypeStruct((rows, n_head), jnp.float32),  # kd|cls slab
        ),
        in_specs=[vmem] * 6,
        out_specs=(vmem, vmem),
        scratch_shapes=[pltpu.VMEM((rows, D), jnp.bfloat16)],
    )(sketch, image, wh, bh, whead, bhead)

    sketch_hash = hash_slab[:B]
    image_hash = hash_slab[B:2 * B]
    sketch_cls = head_slab[:B, K:K + C]
    image_cls = head_slab[B:2 * B, K:K + C]
    image_kd = head_slab[B:2 * B, :K]
    return sketch_hash, image_hash, sketch_cls, image_cls, image_kd


def baseline_fc(sketch_features, image_features, prepared):
    return _baseline_fc_impl(
        sketch_features, image_features,
        prepared["wh"], prepared["bh"], prepared["whead"], prepared["bhead"],
        H=prepared["H"], C=prepared["C"], K=prepared["K"])


def init_params(key, nhash=32, ncls=16, in_features=2048, kd_out=1000):
    k1, k2, k3, k4, k5 = jax.random.split(key, 5)

    # Deterministic surrogate for the pretrained resnet50.fc.weight (1000, 2048):
    # the module SVD-factorizes it to build fc_hash.weight and fc_kd.weight.
    fc_weight_imagenet = np.asarray(
        jax.random.normal(k1, (kd_out, in_features), jnp.float32)) * 0.02
    u, s, vh = np.linalg.svd(fc_weight_imagenet, full_matrices=False)
    w_hash = (np.diag(s[:nhash]) @ vh[:nhash, :]).astype(np.float32)   # (nhash, 2048)
    w_kd = u[:, :nhash].astype(np.float32)                             # (1000, nhash)
    b_kd = np.asarray(jax.random.normal(k2, (kd_out,), jnp.float32)) * 0.01

    # fc_hash bias / fc_cls: default nn.Linear init (uniform +- 1/sqrt(fan_in))
    bound_h = 1.0 / np.sqrt(in_features)
    b_hash = np.asarray(jax.random.uniform(k3, (nhash,), jnp.float32, -bound_h, bound_h))
    bound_c = 1.0 / np.sqrt(nhash)
    w_cls = np.asarray(jax.random.uniform(k4, (ncls, nhash), jnp.float32, -bound_c, bound_c))
    b_cls = np.asarray(jax.random.uniform(k5, (ncls,), jnp.float32, -bound_c, bound_c))

    # BatchNorm1d default parameters / running stats
    bn_gamma = np.ones((nhash,), np.float32)
    bn_beta = np.zeros((nhash,), np.float32)
    bn_mean = np.zeros((nhash,), np.float32)
    bn_var = np.ones((nhash,), np.float32)

    raw = dict(w_hash=w_hash, b_hash=b_hash,
               bn_gamma=bn_gamma, bn_beta=bn_beta, bn_mean=bn_mean, bn_var=bn_var,
               w_cls=w_cls, b_cls=b_cls,
               w_kd=w_kd, b_kd=b_kd.astype(np.float32))
    return {k: jnp.asarray(v) for k, v in raw.items()}


def reference_forward_np(sketch, image, p):
    """Full-precision (float64) reference for the module semantics."""
    f64 = lambda a: np.asarray(a, np.float64)
    scale = f64(p["bn_gamma"]) / np.sqrt(f64(p["bn_var"]) + BN_EPS)

    def fc_hash(x):
        y = x @ f64(p["w_hash"]).T + f64(p["b_hash"])
        return (y - f64(p["bn_mean"])) * scale + f64(p["bn_beta"])

    sk_h = fc_hash(f64(sketch))
    im_h = fc_hash(f64(image))
    sk_c = sk_h @ f64(p["w_cls"]).T + f64(p["b_cls"])
    im_c = im_h @ f64(p["w_cls"]).T + f64(p["b_cls"])
    im_k = im_h @ f64(p["w_kd"]).T + f64(p["b_kd"])
    return sk_h, im_h, sk_c, im_c, im_k


def quantized_reference_np(sketch, image, prep):
    """Mirror of the kernel arithmetic (bf16 operands, high-precision accumulation)."""
    def bf16_round(a):
        return np.asarray(
            jnp.asarray(a).astype(jnp.bfloat16).astype(jnp.float32), np.float64)

    x = np.concatenate([np.asarray(sketch), np.asarray(image)], axis=0)
    x = bf16_round(x)
    wh = bf16_round(prep["wh"])
    bh = np.asarray(prep["bh"], np.float64)
    whead = bf16_round(prep["whead"])
    bhead = np.asarray(prep["bhead"], np.float64)

    h = x @ wh.T + bh
    head = bf16_round(h.astype(np.float32)) @ whead + bhead
    return h, head


if __name__ == "__main__":
    key = jax.random.PRNGKey(0)
    kx, ky, kp = jax.random.split(key, 3)

    B, NHASH, NCLS = 2, 32, 16
    sketch_features = jax.random.normal(kx, (B, 2048), jnp.float32)
    image_features = jax.random.normal(ky, (B, 2048), jnp.float32)
    params = init_params(kp, nhash=NHASH, ncls=NCLS)

    # One-time host-side weight prep (BN fold, bf16, dense layouts, cls|kd fuse).
    prepared = prepare_params(params)
    prepared = jax.tree_util.tree_map(
        lambda x: jax.block_until_ready(x) if isinstance(x, jax.Array) else x,
        prepared)

    outs = baseline_fc(sketch_features, image_features, prepared)
    outs = jax.block_until_ready(outs)

    H, C, K = prepared["H"], prepared["C"], prepared["K"]

    # Tight check: same bf16-quantized arithmetic as the kernel.
    h_q, head_q = quantized_reference_np(sketch_features, image_features, prepared)
    q_refs = (h_q[:B], h_q[B:2 * B],
              head_q[:B, K:K + C], head_q[B:2 * B, K:K + C],
              head_q[B:2 * B, :K])
    for o, r in zip(outs, q_refs):
        assert o.dtype == jnp.float32
        np.testing.assert_allclose(np.asarray(o), r.astype(np.float32),
                                   rtol=2e-3, atol=2e-3)

    # Semantic check vs the full-precision module reference; deviation is
    # bounded by the bf16 weight/activation quantization.
    refs = reference_forward_np(sketch_features, image_features, params)
    for o, r in zip(outs, refs):
        assert o.shape == r.shape
        np.testing.assert_allclose(np.asarray(o), r.astype(np.float32),
                                   rtol=3e-2, atol=3e-2)

    print("KERNEL_OK")
</pallas_src>

<mosaic_0001>
module attributes {stable_mosaic.version = 11 : i64} {
  func.func @baseline_fc_kernel(%arg0: memref<2x2048xf32, #tpu.memory_space<vmem>>, %arg1: memref<2x2048xf32, #tpu.memory_space<vmem>>, %arg2: memref<32x2048xbf16, #tpu.memory_space<vmem>>, %arg3: memref<1x32xf32, #tpu.memory_space<vmem>>, %arg4: memref<32x1024xbf16, #tpu.memory_space<vmem>>, %arg5: memref<1x1024xf32, #tpu.memory_space<vmem>>, %arg6: memref<8x32xf32, #tpu.memory_space<vmem>>, %arg7: memref<8x1024xf32, #tpu.memory_space<vmem>>, %arg8: memref<8x2048xbf16, #tpu.memory_space<vmem>>) attributes {dimension_semantics = [], scalar_prefetch = 0 : i64, scratch_operands = 1 : i64, tpu.core_type = #tpu.core_type<tc>} {
    %cst = arith.constant 0.000000e+00 : bf16
    %0 = vector.broadcast %cst : bf16 to vector<8x2048xbf16>
    %c0 = arith.constant 0 : index
    %c0_0 = arith.constant 0 : index
    %1 = vector.load %arg8[%c0, %c0_0] : memref<8x2048xbf16, #tpu.memory_space<vmem>>, vector<8x2048xbf16>
    tpu.vector_store %arg8[%c0, %c0_0], %0 {strides = array<i32>} : memref<8x2048xbf16, #tpu.memory_space<vmem>>, vector<8x2048xbf16>,
    %c0_1 = arith.constant 0 : index
    %c0_2 = arith.constant 0 : index
    %2 = vector.load %arg0[%c0_1, %c0_2] : memref<2x2048xf32, #tpu.memory_space<vmem>>, vector<2x2048xf32>
    %3 = arith.truncf %2 : vector<2x2048xf32> to vector<2x2048xbf16>
    %c0_3 = arith.constant 0 : index
    %c0_4 = arith.constant 0 : index
    %4 = vector.load %arg8[%c0_3, %c0_4] : memref<8x2048xbf16, #tpu.memory_space<vmem>>, vector<2x2048xbf16>
    tpu.vector_store %arg8[%c0_3, %c0_4], %3 {strides = array<i32>} : memref<8x2048xbf16, #tpu.memory_space<vmem>>, vector<2x2048xbf16>,
    %c0_5 = arith.constant 0 : index
    %c0_6 = arith.constant 0 : index
    %5 = vector.load %arg1[%c0_5, %c0_6] : memref<2x2048xf32, #tpu.memory_space<vmem>>, vector<2x2048xf32>
    %6 = arith.truncf %5 : vector<2x2048xf32> to vector<2x2048xbf16>
    %c2 = arith.constant 2 : index
    %c0_7 = arith.constant 0 : index
    %7 = vector.load %arg8[%c2, %c0_7] : memref<8x2048xbf16, #tpu.memory_space<vmem>>, vector<2x2048xbf16>
    tpu.vector_store %arg8[%c2, %c0_7], %6 {strides = array<i32>} : memref<8x2048xbf16, #tpu.memory_space<vmem>>, vector<2x2048xbf16>,
    %c0_8 = arith.constant 0 : index
    %c0_9 = arith.constant 0 : index
    %8 = vector.load %arg8[%c0_8, %c0_9] : memref<8x2048xbf16, #tpu.memory_space<vmem>>, vector<8x2048xbf16>
    %c0_10 = arith.constant 0 : index
    %c0_11 = arith.constant 0 : index
    %9 = vector.load %arg2[%c0_10, %c0_11] : memref<32x2048xbf16, #tpu.memory_space<vmem>>, vector<32x2048xbf16>
    %10 = tpu.transpose %9, [1, 0] : vector<32x2048xbf16> -> vector<2048x32xbf16>
    %cst_12 = arith.constant dense<0.000000e+00> : vector<8x32xf32>
    %11 = tpu.matmul %8, %10, %cst_12 {dimension_numbers = #tpu.dot_dimension_numbers<[1], [0], [0], [1], [0, 0, 1, 1], [], []>} : vector<8x2048xbf16>, vector<2048x32xbf16>, vector<8x32xf32> -> vector<8x32xf32>
    %c0_13 = arith.constant 0 : index
    %c0_14 = arith.constant 0 : index
    %12 = vector.load %arg3[%c0_13, %c0_14] : memref<1x32xf32, #tpu.memory_space<vmem>>, vector<1x32xf32>
    %13 = vector.broadcast %12 : vector<1x32xf32> to vector<8x32xf32>
    %14 = arith.addf %11, %13 : vector<8x32xf32>
    %c0_15 = arith.constant 0 : index
    %c0_16 = arith.constant 0 : index
    %15 = vector.load %arg6[%c0_15, %c0_16] : memref<8x32xf32, #tpu.memory_space<vmem>>, vector<8x32xf32>
    tpu.vector_store %arg6[%c0_15, %c0_16], %14 {strides = array<i32>} : memref<8x32xf32, #tpu.memory_space<vmem>>, vector<8x32xf32>,
    %16 = arith.truncf %14 : vector<8x32xf32> to vector<8x32xbf16>
    %c0_17 = arith.constant 0 : index
    %c0_18 = arith.constant 0 : index
    %17 = vector.load %arg4[%c0_17, %c0_18] : memref<32x1024xbf16, #tpu.memory_space<vmem>>, vector<32x1024xbf16>
    %cst_19 = arith.constant dense<0.000000e+00> : vector<8x1024xf32>
    %18 = tpu.matmul %16, %17, %cst_19 {dimension_numbers = #tpu.dot_dimension_numbers<[1], [0], [0], [1], [0, 0, 1, 1], [], []>} : vector<8x32xbf16>, vector<32x1024xbf16>, vector<8x1024xf32> -> vector<8x1024xf32>
    %c0_20 = arith.constant 0 : index
    %c0_21 = arith.constant 0 : index
    %19 = vector.load %arg5[%c0_20, %c0_21] : memref<1x1024xf32, #tpu.memory_space<vmem>>, vector<1x1024xf32>
    %20 = vector.broadcast %19 : vector<1x1024xf32> to vector<8x1024xf32>
    %21 = arith.addf %18, %20 : vector<8x1024xf32>
    %c0_22 = arith.constant 0 : index
    %c0_23 = arith.constant 0 : index
    %22 = vector.load %arg7[%c0_22, %c0_23] : memref<8x1024xf32, #tpu.memory_space<vmem>>, vector<8x1024xf32>
    tpu.vector_store %arg7[%c0_22, %c0_23], %21 {strides = array<i32>} : memref<8x1024xf32, #tpu.memory_space<vmem>>, vector<8x1024xf32>,
    return
  }
}

</mosaic_0001>

<llo_original>
// kernel: _baseline_fc_impl.1
$region0: #{_baseline_fc_impl.1}
  #allocation0 [shape = 'u32[]', space=smem, size = 0x4, offset = 0x4, fixed_abs, tag = 'smem constant byte address 0x4 - core index']
  #allocation1 [shape = 'u32[72,128]{1,0:T(1,128)}', space=vmem, size = 0x9000, scoped, tag = 'internal scratch']
  #allocation2 [shape = 'bf16[8,2048]{1,0:T(8,128)(2,1)}', space=vmem, size = 0x8000, scoped, tag = 'scratch operand']
  %s0 = inlined_call_operand.hbm [shape: f32[2,2048], index: 0, kind: input, shape index: {}]
  %s1 = inlined_call_operand.hbm [shape: f32[2,2048], index: 1, kind: input, shape index: {}]
  %s2 = inlined_call_operand.hbm [shape: bf16[32,2048], index: 2, kind: input, shape index: {}]
  %s3 = inlined_call_operand.vmem [shape: f32[1,32], index: 3, kind: input, shape index: {}]
  %s4 = inlined_call_operand.hbm [shape: bf16[32,1024], index: 4, kind: input, shape index: {}]
  %s5 = inlined_call_operand.hbm [shape: f32[1,1024], index: 5, kind: input, shape index: {}]
  %s6 = inlined_call_operand.vmem [shape: f32[8,32], index: 6, kind: output, shape index: {0}]
  %s7 = inlined_call_operand.vmem [shape: f32[8,1024], index: 7, kind: output, shape index: {1}]
  %8 = xla_tuple %s6, %s7
  %s9 = sld [smem:[#allocation0]]
  $region62: #{_baseline_fc_impl.1} parent=0
    _
  %s11 = ssub.s32 1, %s9
  %s12 = scalar_select 0, %s11, %s9
  $region1: #{_baseline_fc_impl.1} parent=0
    #allocation3 [shape = 'u8[16384]{0}', space=vmem, size = 0x4000, scoped, tag = 'input window, operand 0, single buffered']
    #allocation4 [shape = 's32[1]{0}', space=sflag, size = 0x4, scoped, tag = 'scoped memory for _baseline_fc_impl.1']
    #allocation5 [shape = 'u8[16384]{0}', space=vmem, size = 0x4000, scoped, tag = 'input window, operand 1, single buffered']
    #allocation6 [shape = 's32[1]{0}', space=sflag, size = 0x4, scoped, tag = 'scoped memory for _baseline_fc_impl.1']
    #allocation7 [shape = 'u8[131072]{0}', space=vmem, size = 0x20000, scoped, tag = 'input window, operand 2, single buffered']
    #allocation8 [shape = 'u8[65536]{0}', space=vmem, size = 0x10000, scoped, tag = 'input window, operand 4, single buffered']
    #allocation9 [shape = 's32[1]{0}', space=sflag, size = 0x4, scoped, tag = 'scoped memory for _baseline_fc_impl.1']
    #allocation10 [shape = 'u8[4096]{0}', space=vmem, size = 0x1000, scoped, tag = 'input window, operand 5, single buffered']
    %13 = vsyncpa [#allocation4], 0
    %14 = vsyncpa [#allocation6], 0
    %15 = vsyncpa [#allocation9], 0
    // Predicated region
    $region2: #{_baseline_fc_impl.1} parent=1 // pred_check
      _
    $region3: #{_baseline_fc_impl.1} parent=1 // pred_check_branch
      %17 = sbr.rel (0) target = $region5
    $region4: #{_baseline_fc_impl.1} parent=1 // pred_region
      %19 = vsyncadd [#allocation4], 0
      %s21 = sshll.u32 %s0, 4
      %s22 = int_to_ptr.hbm [resolvable:$true] %s21
      %s23 = sshll.u32 [#allocation3], 4
      %s24 = int_to_ptr.vmem [resolvable:$true] %s23
      %26 = dma.hbm_to_vmem [thread:$0]  %s22, 512, %s24, [#allocation4]
    $region5: #{_baseline_fc_impl.1} parent=1 // pred_fallthru
      _
    // Predicated region
    $region6: #{_baseline_fc_impl.1} parent=1 // pred_check
      _
    $region7: #{_baseline_fc_impl.1} parent=1 // pred_check_branch
      %28 = sbr.rel (0) target = $region9
    $region8: #{_baseline_fc_impl.1} parent=1 // pred_region
      %30 = vsyncadd [#allocation6], 0
      %s32 = sshll.u32 %s1, 4
      %s33 = int_to_ptr.hbm [resolvable:$true] %s32
      %s34 = sshll.u32 [#allocation5], 4
      %s35 = int_to_ptr.vmem [resolvable:$true] %s34
      %37 = dma.hbm_to_vmem [thread:$0]  %s33, 512, %s35, [#allocation6]
    $region9: #{_baseline_fc_impl.1} parent=1 // pred_fallthru
      _
    // Predicated region
    $region10: #{_baseline_fc_impl.1} parent=1 // pred_check
      _
    $region11: #{_baseline_fc_impl.1} parent=1 // pred_check_branch
      %39 = sbr.rel (0) target = $region13
    $region12: #{_baseline_fc_impl.1} parent=1 // pred_region
      %41 = vsyncadd [#allocation6], 0
      %s42 = sshll.u32 %s2, 4
      %s43 = int_to_ptr.hbm [resolvable:$true] %s42
      %s44 = sshll.u32 [#allocation7], 4
      %s45 = int_to_ptr.vmem [resolvable:$true] %s44
      %50 = dma.hbm_to_vmem [thread:$0]  %s43, 4096, %s45, [#allocation6], 1024, 1024, 64
    $region13: #{_baseline_fc_impl.1} parent=1 // pred_fallthru
      _
    // Predicated region
    $region14: #{_baseline_fc_impl.1} parent=1 // pred_check
      _
    $region15: #{_baseline_fc_impl.1} parent=1 // pred_check_branch
      %52 = sbr.rel (0) target = $region17
    $region16: #{_baseline_fc_impl.1} parent=1 // pred_region
      _
    $region17: #{_baseline_fc_impl.1} parent=1 // pred_fallthru
      _
    // Predicated region
    $region18: #{_baseline_fc_impl.1} parent=1 // pred_check
      _
    $region19: #{_baseline_fc_impl.1} parent=1 // pred_check_branch
      %54 = sbr.rel (0) target = $region21
    $region20: #{_baseline_fc_impl.1} parent=1 // pred_region
      %56 = vsyncadd [#allocation9], 0
      %s57 = sshll.u32 %s4, 4
      %s58 = int_to_ptr.hbm [resolvable:$true] %s57
      %s59 = sshll.u32 [#allocation8], 4
      %s60 = int_to_ptr.vmem [resolvable:$true] %s59
      %65 = dma.hbm_to_vmem [thread:$0]  %s58, 2048, %s60, [#allocation9], 512, 512, 32
    $region21: #{_baseline_fc_impl.1} parent=1 // pred_fallthru
      _
    // Predicated region
    $region22: #{_baseline_fc_impl.1} parent=1 // pred_check
      _
    $region23: #{_baseline_fc_impl.1} parent=1 // pred_check_branch
      %67 = sbr.rel (0) target = $region25
    $region24: #{_baseline_fc_impl.1} parent=1 // pred_region
      %69 = vsyncadd [#allocation9], 0
      %s71 = sshll.u32 %s5, 4
      %s72 = int_to_ptr.hbm [resolvable:$true] %s71
      %s73 = sshll.u32 [#allocation10], 4
      %s74 = int_to_ptr.vmem [resolvable:$true] %s73
      %76 = dma.hbm_to_vmem [thread:$0]  %s72, 128, %s74, [#allocation9]
    $region25: #{_baseline_fc_impl.1} parent=1 // pred_fallthru
      _
    // Predicated region
    $region26: #{_baseline_fc_impl.1} parent=1 // pred_check
      _
    $region27: #{_baseline_fc_impl.1} parent=1 // pred_check_branch
      %78 = sbr.rel (0) target = $region29
    $region28: #{_baseline_fc_impl.1} parent=1 // pred_region
      %80 = dma.done [#allocation4], 512
    $region29: #{_baseline_fc_impl.1} parent=1 // pred_fallthru
      _
    // Predicated region
    $region30: #{_baseline_fc_impl.1} parent=1 // pred_check
      _
    $region31: #{_baseline_fc_impl.1} parent=1 // pred_check_branch
      %82 = sbr.rel (0) target = $region33
    $region32: #{_baseline_fc_impl.1} parent=1 // pred_region
      %84 = dma.done [#allocation6], 512
    $region33: #{_baseline_fc_impl.1} parent=1 // pred_fallthru
      _
    // Predicated region
    $region34: #{_baseline_fc_impl.1} parent=1 // pred_check
      _
    $region35: #{_baseline_fc_impl.1} parent=1 // pred_check_branch
      %86 = sbr.rel (0) target = $region37
    $region36: #{_baseline_fc_impl.1} parent=1 // pred_region
      %88 = dma.done [#allocation6], 4096
    $region37: #{_baseline_fc_impl.1} parent=1 // pred_fallthru
      _
    // Predicated region
    $region38: #{_baseline_fc_impl.1} parent=1 // pred_check
      _
    $region39: #{_baseline_fc_impl.1} parent=1 // pred_check_branch
      %90 = sbr.rel (0) target = $region41
    $region40: #{_baseline_fc_impl.1} parent=1 // pred_region
      %92 = dma.done [#allocation9], 2048
    $region41: #{_baseline_fc_impl.1} parent=1 // pred_fallthru
      _
    // Predicated region
    $region42: #{_baseline_fc_impl.1} parent=1 // pred_check
      _
    $region43: #{_baseline_fc_impl.1} parent=1 // pred_check_branch
      %94 = sbr.rel (0) target = $region45
    $region44: #{_baseline_fc_impl.1} parent=1 // pred_region
      %96 = dma.done [#allocation9], 128
    $region45: #{_baseline_fc_impl.1} parent=1 // pred_fallthru
      _
    %98 = vst [vmem:[#allocation2] sm:$0xff] 0
    %99 = vst [vmem:[#allocation2 + $0x8] sm:$0xff] 0
    %100 = vst [vmem:[#allocation2 + $0x10] sm:$0xff] 0
    %101 = vst [vmem:[#allocation2 + $0x18] sm:$0xff] 0
    %102 = vst [vmem:[#allocation2 + $0x20] sm:$0xff] 0
    %103 = vst [vmem:[#allocation2 + $0x28] sm:$0xff] 0
    %104 = vst [vmem:[#allocation2 + $0x30] sm:$0xff] 0
    %105 = vst [vmem:[#allocation2 + $0x38] sm:$0xff] 0
    %v106 = vld [vmem:[#allocation3] sm:$0xff]
    %v107 = vld [vmem:[#allocation3 + $0x8] sm:$0xff]
    %v108 = vld [vmem:[#allocation3 + $0x10] sm:$0xff]
    %v109 = vld [vmem:[#allocation3 + $0x18] sm:$0xff]
    %114 = vst [vmem:[#allocation1] ss:$4 sm:$0xff] %v106
    %s115 = scalar_lea.vmem [#allocation1], 32
    %116 = vst [vmem:[%s115] ss:$4 sm:$0xff] %v107
    %v117 = vld.sshfl [vmem:[#allocation1] sm:$0xff pattern:$0x73625140]
    %v118 = vld.sshfl [vmem:[#allocation1 + $0x8] sm:$0xff pattern:$0x73625140]
    %v119 = vld.sshfl [vmem:[#allocation1 + $0x10] sm:$0xff pattern:$0x73625140]
    %v120 = vld.sshfl [vmem:[#allocation1 + $0x18] sm:$0xff pattern:$0x73625140]
    %v121 = vld.sshfl [vmem:[#allocation1 + $0x20] sm:$0xff pattern:$0x73625140]
    %v122 = vld.sshfl [vmem:[#allocation1 + $0x28] sm:$0xff pattern:$0x73625140]
    %v123 = vld.sshfl [vmem:[#allocation1 + $0x30] sm:$0xff pattern:$0x73625140]
    %v124 = vld.sshfl [vmem:[#allocation1 + $0x38] sm:$0xff pattern:$0x73625140]
    %125 = vst [vmem:[#allocation1] ss:$4 sm:$0xff] %v108
    %126 = vst [vmem:[%s115] ss:$4 sm:$0xff] %v109
    %v127 = vld.sshfl [vmem:[#allocation1] sm:$0xff pattern:$0x73625140]
    %v128 = vld.sshfl [vmem:[#allocation1 + $0x8] sm:$0xff pattern:$0x73625140]
    %v129 = vld.sshfl [vmem:[#allocation1 + $0x10] sm:$0xff pattern:$0x73625140]
    %v130 = vld.sshfl [vmem:[#allocation1 + $0x18] sm:$0xff pattern:$0x73625140]
    %v131 = vld.sshfl [vmem:[#allocation1 + $0x20] sm:$0xff pattern:$0x73625140]
    %v132 = vld.sshfl [vmem:[#allocation1 + $0x28] sm:$0xff pattern:$0x73625140]
    %v133 = vld.sshfl [vmem:[#allocation1 + $0x30] sm:$0xff pattern:$0x73625140]
    %v134 = vld.sshfl [vmem:[#allocation1 + $0x38] sm:$0xff pattern:$0x73625140]
    %v151 = vpack.c.bf16 %v118, %v117
    %v152 = vpack.c.bf16 %v120, %v119
    %v153 = vpack.c.bf16 %v122, %v121
    %v154 = vpack.c.bf16 %v124, %v123
    %v155 = vpack.c.bf16 %v128, %v127
    %v156 = vpack.c.bf16 %v130, %v129
    %v157 = vpack.c.bf16 %v132, %v131
    %v158 = vpack.c.bf16 %v134, %v133
    %159 = vst [vmem:[#allocation2] sm:$0x11] %v151
    %160 = vst [vmem:[#allocation2 + $0x8] sm:$0x11] %v152
    %161 = vst [vmem:[#allocation2 + $0x10] sm:$0x11] %v153
    %162 = vst [vmem:[#allocation2 + $0x18] sm:$0x11] %v154
    %163 = vst [vmem:[#allocation2 + $0x20] sm:$0x11] %v155
    %164 = vst [vmem:[#allocation2 + $0x28] sm:$0x11] %v156
    %165 = vst [vmem:[#allocation2 + $0x30] sm:$0x11] %v157
    %166 = vst [vmem:[#allocation2 + $0x38] sm:$0x11] %v158
    %v167 = vld [vmem:[#allocation5] sm:$0xff]
    %v168 = vld [vmem:[#allocation5 + $0x8] sm:$0xff]
    %v169 = vld [vmem:[#allocation5 + $0x10] sm:$0xff]
    %v170 = vld [vmem:[#allocation5 + $0x18] sm:$0xff]
    %175 = vst [vmem:[#allocation1] ss:$4 sm:$0xff] %v167
    %s176 = scalar_lea.vmem [#allocation1], 32
    %177 = vst [vmem:[%s176] ss:$4 sm:$0xff] %v168
    %v178 = vld.sshfl [vmem:[#allocation1] sm:$0xff pattern:$0x73625140]
    %v179 = vld.sshfl [vmem:[#allocation1 + $0x8] sm:$0xff pattern:$0x73625140]
    %v180 = vld.sshfl [vmem:[#allocation1 + $0x10] sm:$0xff pattern:$0x73625140]
    %v181 = vld.sshfl [vmem:[#allocation1 + $0x18] sm:$0xff pattern:$0x73625140]
    %v182 = vld.sshfl [vmem:[#allocation1 + $0x20] sm:$0xff pattern:$0x73625140]
    %v183 = vld.sshfl [vmem:[#allocation1 + $0x28] sm:$0xff pattern:$0x73625140]
    %v184 = vld.sshfl [vmem:[#allocation1 + $0x30] sm:$0xff pattern:$0x73625140]
    %v185 = vld.sshfl [vmem:[#allocation1 + $0x38] sm:$0xff pattern:$0x73625140]
    %186 = vst [vmem:[#allocation1] ss:$4 sm:$0xff] %v169
    %187 = vst [vmem:[%s176] ss:$4 sm:$0xff] %v170
    %v188 = vld.sshfl [vmem:[#allocation1] sm:$0xff pattern:$0x73625140]
    %v189 = vld.sshfl [vmem:[#allocation1 + $0x8] sm:$0xff pattern:$0x73625140]
    %v190 = vld.sshfl [vmem:[#allocation1 + $0x10] sm:$0xff pattern:$0x73625140]
    %v191 = vld.sshfl [vmem:[#allocation1 + $0x18] sm:$0xff pattern:$0x73625140]
    %v192 = vld.sshfl [vmem:[#allocation1 + $0x20] sm:$0xff pattern:$0x73625140]
    %v193 = vld.sshfl [vmem:[#allocation1 + $0x28] sm:$0xff pattern:$0x73625140]
    %v194 = vld.sshfl [vmem:[#allocation1 + $0x30] sm:$0xff pattern:$0x73625140]
    %v195 = vld.sshfl [vmem:[#allocation1 + $0x38] sm:$0xff pattern:$0x73625140]
    %v212 = vpack.c.bf16 %v179, %v178
    %v213 = vpack.c.bf16 %v181, %v180
    %v214 = vpack.c.bf16 %v183, %v182
    %v215 = vpack.c.bf16 %v185, %v184
    %v216 = vpack.c.bf16 %v189, %v188
    %v217 = vpack.c.bf16 %v191, %v190
    %v218 = vpack.c.bf16 %v193, %v192
    %v219 = vpack.c.bf16 %v195, %v194
    %v228 = vrot.slane %v212, 7
    %v229 = vrot.slane %v213, 7
    %v230 = vrot.slane %v214, 7
    %v231 = vrot.slane %v215, 7
    %v232 = vrot.slane %v216, 7
    %v233 = vrot.slane %v217, 7
    %v234 = vrot.slane %v218, 7
    %v235 = vrot.slane %v219, 7
    %244 = vst [vmem:[#allocation2] sm:$0x22] %v228
    %245 = vst [vmem:[#allocation2 + $0x8] sm:$0x22] %v229
    %246 = vst [vmem:[#allocation2 + $0x10] sm:$0x22] %v230
    %247 = vst [vmem:[#allocation2 + $0x18] sm:$0x22] %v231
    %248 = vst [vmem:[#allocation2 + $0x20] sm:$0x22] %v232
    %249 = vst [vmem:[#allocation2 + $0x28] sm:$0x22] %v233
    %250 = vst [vmem:[#allocation2 + $0x30] sm:$0x22] %v234
    %251 = vst [vmem:[#allocation2 + $0x38] sm:$0x22] %v235
    %v252 = vld [vmem:[#allocation2] sm:$0xff]
    %v253 = vld [vmem:[#allocation2 + $0x8] sm:$0xff]
    %v254 = vld [vmem:[#allocation2 + $0x10] sm:$0xff]
    %v255 = vld [vmem:[#allocation2 + $0x18] sm:$0xff]
    %v256 = vld [vmem:[#allocation2 + $0x20] sm:$0xff]
    %v257 = vld [vmem:[#allocation2 + $0x28] sm:$0xff]
    %v258 = vld [vmem:[#allocation2 + $0x30] sm:$0xff]
    %v259 = vld [vmem:[#allocation2 + $0x38] sm:$0xff]
    %v260 = vld [vmem:[#allocation7] sm:$0xff]
    %v261 = vld [vmem:[#allocation7 + $0x8] sm:$0xff]
    %v262 = vld [vmem:[#allocation7 + $0x10] sm:$0xff]
    %v263 = vld [vmem:[#allocation7 + $0x18] sm:$0xff]
    %v264 = vld [vmem:[#allocation7 + $0x20] sm:$0xff]
    %v265 = vld [vmem:[#allocation7 + $0x28] sm:$0xff]
    %v266 = vld [vmem:[#allocation7 + $0x30] sm:$0xff]
    %v267 = vld [vmem:[#allocation7 + $0x38] sm:$0xff]
    %v268 = vld [vmem:[#allocation7 + $0x40] sm:$0xff]
    %v269 = vld [vmem:[#allocation7 + $0x48] sm:$0xff]
    %v270 = vld [vmem:[#allocation7 + $0x50] sm:$0xff]
    %v271 = vld [vmem:[#allocation7 + $0x58] sm:$0xff]
    %v272 = vld [vmem:[#allocation7 + $0x60] sm:$0xff]
    %v273 = vld [vmem:[#allocation7 + $0x68] sm:$0xff]
    %v274 = vld [vmem:[#allocation7 + $0x70] sm:$0xff]
    %v275 = vld [vmem:[#allocation7 + $0x78] sm:$0xff]
    %v276 = vld [vmem:[#allocation7 + $0x80] sm:$0xff]
    %v277 = vld [vmem:[#allocation7 + $0x88] sm:$0xff]
    %v278 = vld [vmem:[#allocation7 + $0x90] sm:$0xff]
    %v279 = vld [vmem:[#allocation7 + $0x98] sm:$0xff]
    %v280 = vld [vmem:[#allocation7 + $0xa0] sm:$0xff]
    %v281 = vld [vmem:[#allocation7 + $0xa8] sm:$0xff]
    %v282 = vld [vmem:[#allocation7 + $0xb0] sm:$0xff]
    %v283 = vld [vmem:[#allocation7 + $0xb8] sm:$0xff]
    %v284 = vld [vmem:[#allocation7 + $0xc0] sm:$0xff]
    %v285 = vld [vmem:[#allocation7 + $0xc8] sm:$0xff]
    %v286 = vld [vmem:[#allocation7 + $0xd0] sm:$0xff]
    %v287 = vld [vmem:[#allocation7 + $0xd8] sm:$0xff]
    %v288 = vld [vmem:[#allocation7 + $0xe0] sm:$0xff]
    %v289 = vld [vmem:[#allocation7 + $0xe8] sm:$0xff]
    %v290 = vld [vmem:[#allocation7 + $0xf0] sm:$0xff]
    %v291 = vld [vmem:[#allocation7 + $0xf8] sm:$0xff]
    %v292 = vld [vmem:[%s3] sm:$0x1]
    %v294 = vperm.slane %v292, 0
    %v304 = vunpack.c.l.b16 %v252
    %v305 = vunpack.c.h.b16 %v252
    %v306 = vunpack.c.l.b16 %v253
    %v307 = vunpack.c.h.b16 %v253
    %v308 = vunpack.c.l.b16 %v254
    %v309 = vunpack.c.h.b16 %v254
    %v310 = vunpack.c.l.b16 %v255
    %v311 = vunpack.c.h.b16 %v255
    %v312 = vunpack.c.l.b16 %v256
    %v313 = vunpack.c.h.b16 %v256
    %v314 = vunpack.c.l.b16 %v257
    %v315 = vunpack.c.h.b16 %v257
    %v316 = vunpack.c.l.b16 %v258
    %v317 = vunpack.c.h.b16 %v258
    %v318 = vunpack.c.l.b16 %v259
    %v319 = vunpack.c.h.b16 %v259
    %v320 = vpack.c.b16 %v304, %v304
    %v321 = vpack.c.b16 %v305, %v305
    %v322 = vpack.c.b16 %v306, %v306
    %v323 = vpack.c.b16 %v307, %v307
    %v324 = vpack.c.b16 %v308, %v308
    %v325 = vpack.c.b16 %v309, %v309
    %v326 = vpack.c.b16 %v310, %v310
    %v327 = vpack.c.b16 %v311, %v311
    %v328 = vpack.c.b16 %v312, %v312
    %v329 = vpack.c.b16 %v313, %v313
    %v330 = vpack.c.b16 %v314, %v314
    %v331 = vpack.c.b16 %v315, %v315
    %v332 = vpack.c.b16 %v316, %v316
    %v333 = vpack.c.b16 %v317, %v317
    %v334 = vpack.c.b16 %v318, %v318
    %v335 = vpack.c.b16 %v319, %v319
    %v384 = vunpack.c.l.b16 %v260
    %v385 = vunpack.c.h.b16 %v260
    %v386 = vunpack.c.l.b16 %v261
    %v387 = vunpack.c.h.b16 %v261
    %v388 = vunpack.c.l.b16 %v262
    %v389 = vunpack.c.h.b16 %v262
    %v390 = vunpack.c.l.b16 %v263
    %v391 = vunpack.c.h.b16 %v263
    %v392 = vunpack.c.l.b16 %v264
    %v393 = vunpack.c.h.b16 %v264
    %v394 = vunpack.c.l.b16 %v265
    %v395 = vunpack.c.h.b16 %v265
    %v396 = vunpack.c.l.b16 %v266
    %v397 = vunpack.c.h.b16 %v266
    %v398 = vunpack.c.l.b16 %v267
    %v399 = vunpack.c.h.b16 %v267
    %v400 = vunpack.c.l.b16 %v268
    %v401 = vunpack.c.h.b16 %v268
    %v402 = vunpack.c.l.b16 %v269
    %v403 = vunpack.c.h.b16 %v269
    %v404 = vunpack.c.l.b16 %v270
    %v405 = vunpack.c.h.b16 %v270
    %v406 = vunpack.c.l.b16 %v271
    %v407 = vunpack.c.h.b16 %v271
    %v408 = vunpack.c.l.b16 %v272
    %v409 = vunpack.c.h.b16 %v272
    %v410 = vunpack.c.l.b16 %v273
    %v411 = vunpack.c.h.b16 %v273
    %v412 = vunpack.c.l.b16 %v274
    %v413 = vunpack.c.h.b16 %v274
    %v414 = vunpack.c.l.b16 %v275
    %v415 = vunpack.c.h.b16 %v275
    %v416 = vunpack.c.l.b16 %v276
    %v417 = vunpack.c.h.b16 %v276
    %v418 = vunpack.c.l.b16 %v277
    %v419 = vunpack.c.h.b16 %v277
    %v420 = vunpack.c.l.b16 %v278
    %v421 = vunpack.c.h.b16 %v278
    %v422 = vunpack.c.l.b16 %v279
    %v423 = vunpack.c.h.b16 %v279
    %v424 = vunpack.c.l.b16 %v280
    %v425 = vunpack.c.h.b16 %v280
    %v426 = vunpack.c.l.b16 %v281
    %v427 = vunpack.c.h.b16 %v281
    %v428 = vunpack.c.l.b16 %v282
    %v429 = vunpack.c.h.b16 %v282
    %v430 = vunpack.c.l.b16 %v283
    %v431 = vunpack.c.h.b16 %v283
    %v432 = vunpack.c.l.b16 %v284
    %v433 = vunpack.c.h.b16 %v284
    %v434 = vunpack.c.l.b16 %v285
    %v435 = vunpack.c.h.b16 %v285
    %v436 = vunpack.c.l.b16 %v286
    %v437 = vunpack.c.h.b16 %v286
    %v438 = vunpack.c.l.b16 %v287
    %v439 = vunpack.c.h.b16 %v287
    %v440 = vunpack.c.l.b16 %v288
    %v441 = vunpack.c.h.b16 %v288
    %v442 = vunpack.c.l.b16 %v289
    %v443 = vunpack.c.h.b16 %v289
    %v444 = vunpack.c.l.b16 %v290
    %v445 = vunpack.c.h.b16 %v290
    %v446 = vunpack.c.l.b16 %v291
    %v447 = vunpack.c.h.b16 %v291
    %v448 = vpack.c.b16 %v400, %v384
    %v449 = vpack.c.b16 %v401, %v385
    %v450 = vpack.c.b16 %v402, %v386
    %v451 = vpack.c.b16 %v403, %v387
    %v452 = vpack.c.b16 %v404, %v388
    %v453 = vpack.c.b16 %v405, %v389
    %v454 = vpack.c.b16 %v406, %v390
    %v455 = vpack.c.b16 %v407, %v391
    %v456 = vpack.c.b16 %v408, %v392
    %v457 = vpack.c.b16 %v409, %v393
    %v458 = vpack.c.b16 %v410, %v394
    %v459 = vpack.c.b16 %v411, %v395
    %v460 = vpack.c.b16 %v412, %v396
    %v461 = vpack.c.b16 %v413, %v397
    %v462 = vpack.c.b16 %v414, %v398
    %v463 = vpack.c.b16 %v415, %v399
    %v464 = vpack.c.b16 %v432, %v416
    %v465 = vpack.c.b16 %v433, %v417
    %v466 = vpack.c.b16 %v434, %v418
    %v467 = vpack.c.b16 %v435, %v419
    %v468 = vpack.c.b16 %v436, %v420
    %v469 = vpack.c.b16 %v437, %v421
    %v470 = vpack.c.b16 %v438, %v422
    %v471 = vpack.c.b16 %v439, %v423
    %v472 = vpack.c.b16 %v440, %v424
    %v473 = vpack.c.b16 %v441, %v425
    %v474 = vpack.c.b16 %v442, %v426
    %v475 = vpack.c.b16 %v443, %v427
    %v476 = vpack.c.b16 %v444, %v428
    %v477 = vpack.c.b16 %v445, %v429
    %v478 = vpack.c.b16 %v446, %v430
    %v479 = vpack.c.b16 %v447, %v431
    %512 = vmatpush.bf16.xpose.msra.mxu0 0
    %513 = vmatpush.bf16.xpose.msra.mxu0 0
    %514 = vmatpush.bf16.xpose.msra.mxu0 0
    %515 = vmatpush.bf16.xpose.msra.mxu0 0
    %516 = vmatpush.bf16.xpose.msra.mxu0 0
    %517 = vmatpush.bf16.xpose.msra.mxu0 0
    %518 = vmatpush.bf16.xpose.msra.mxu0 %v464
    %519 = vmatpush.bf16.xpose.msra.mxu0 %v448
    %520 = vmatmul.bf16.gmra.mxu0 %v320
    %v521 = vpop.f32.mrf.mxu0
    %v522 = vadd.f32 %v294, %v521
    %v523 = vpop.f32.mrf.mxu0
    %524 = vdwg.mxu0
    %525 = vmatpush.bf16.xpose.msra.mxu0 0
    %526 = vmatpush.bf16.xpose.msra.mxu0 0
    %527 = vmatpush.bf16.xpose.msra.mxu0 0
    %528 = vmatpush.bf16.xpose.msra.mxu0 0
    %529 = vmatpush.bf16.xpose.msra.mxu0 0
    %530 = vmatpush.bf16.xpose.msra.mxu0 0
    %531 = vmatpush.bf16.xpose.msra.mxu0 %v465
    %532 = vmatpush.bf16.xpose.msra.mxu0 %v449
    %533 = vmatmul.bf16.gmra.mxu0 %v321
    %v534 = vpop.f32.mrf.mxu0
    %v535 = vadd.f32 %v522, %v534
    %v536 = vpop.f32.mrf.mxu0
    %537 = vdwg.mxu0
    %538 = vmatpush.bf16.xpose.msra.mxu0 0
    %539 = vmatpush.bf16.xpose.msra.mxu0 0
    %540 = vmatpush.bf16.xpose.msra.mxu0 0
    %541 = vmatpush.bf16.xpose.msra.mxu0 0
    %542 = vmatpush.bf16.xpose.msra.mxu0 0
    %543 = vmatpush.bf16.xpose.msra.mxu0 0
    %544 = vmatpush.bf16.xpose.msra.mxu0 %v466
    %545 = vmatpush.bf16.xpose.msra.mxu0 %v450
    %546 = vmatmul.bf16.gmra.mxu0 %v322
    %v547 = vpop.f32.mrf.mxu0
    %v548 = vadd.f32 %v535, %v547
    %v549 = vpop.f32.mrf.mxu0
    %550 = vdwg.mxu0
    %551 = vmatpush.bf16.xpose.msra.mxu0 0
    %552 = vmatpush.bf16.xpose.msra.mxu0 0
    %553 = vmatpush.bf16.xpose.msra.mxu0 0
    %554 = vmatpush.bf16.xpose.msra.mxu0 0
    %555 = vmatpush.bf16.xpose.msra.mxu0 0
    %556 = vmatpush.bf16.xpose.msra.mxu0 0
    %557 = vmatpush.bf16.xpose.msra.mxu0 %v467
    %558 = vmatpush.bf16.xpose.msra.mxu0 %v451
    %559 = vmatmul.bf16.gmra.mxu0 %v323
    %v560 = vpop.f32.mrf.mxu0
    %v561 = vadd.f32 %v548, %v560
    %v562 = vpop.f32.mrf.mxu0
    %563 = vdwg.mxu0
    %564 = vmatpush.bf16.xpose.msra.mxu0 0
    %565 = vmatpush.bf16.xpose.msra.mxu0 0
    %566 = vmatpush.bf16.xpose.msra.mxu0 0
    %567 = vmatpush.bf16.xpose.msra.mxu0 0
    %568 = vmatpush.bf16.xpose.msra.mxu0 0
    %569 = vmatpush.bf16.xpose.msra.mxu0 0
    %570 = vmatpush.bf16.xpose.msra.mxu0 %v468
    %571 = vmatpush.bf16.xpose.msra.mxu0 %v452
    %572 = vmatmul.bf16.gmra.mxu0 %v324
    %v573 = vpop.f32.mrf.mxu0
    %v574 = vadd.f32 %v561, %v573
    %v575 = vpop.f32.mrf.mxu0
    %576 = vdwg.mxu0
    %577 = vmatpush.bf16.xpose.msra.mxu0 0
    %578 = vmatpush.bf16.xpose.msra.mxu0 0
    %579 = vmatpush.bf16.xpose.msra.mxu0 0
    %580 = vmatpush.bf16.xpose.msra.mxu0 0
    %581 = vmatpush.bf16.xpose.msra.mxu0 0
    %582 = vmatpush.bf16.xpose.msra.mxu0 0
    %583 = vmatpush.bf16.xpose.msra.mxu0 %v469
    %584 = vmatpush.bf16.xpose.msra.mxu0 %v453
    %585 = vmatmul.bf16.gmra.mxu0 %v325
    %v586 = vpop.f32.mrf.mxu0
    %v587 = vadd.f32 %v574, %v586
    %v588 = vpop.f32.mrf.mxu0
    %589 = vdwg.mxu0
    %590 = vmatpush.bf16.xpose.msra.mxu0 0
    %591 = vmatpush.bf16.xpose.msra.mxu0 0
    %592 = vmatpush.bf16.xpose.msra.mxu0 0
    %593 = vmatpush.bf16.xpose.msra.mxu0 0
    %594 = vmatpush.bf16.xpose.msra.mxu0 0
    %595 = vmatpush.bf16.xpose.msra.mxu0 0
    %596 = vmatpush.bf16.xpose.msra.mxu0 %v470
    %597 = vmatpush.bf16.xpose.msra.mxu0 %v454
    %598 = vmatmul.bf16.gmra.mxu0 %v326
    %v599 = vpop.f32.mrf.mxu0
    %v600 = vadd.f32 %v587, %v599
    %v601 = vpop.f32.mrf.mxu0
    %602 = vdwg.mxu0
    %603 = vmatpush.bf16.xpose.msra.mxu0 0
    %604 = vmatpush.bf16.xpose.msra.mxu0 0
    %605 = vmatpush.bf16.xpose.msra.mxu0 0
    %606 = vmatpush.bf16.xpose.msra.mxu0 0
    %607 = vmatpush.bf16.xpose.msra.mxu0 0
    %608 = vmatpush.bf16.xpose.msra.mxu0 0
    %609 = vmatpush.bf16.xpose.msra.mxu0 %v471
    %610 = vmatpush.bf16.xpose.msra.mxu0 %v455
    %611 = vmatmul.bf16.gmra.mxu0 %v327
    %v612 = vpop.f32.mrf.mxu0
    %v613 = vadd.f32 %v600, %v612
    %v614 = vpop.f32.mrf.mxu0
    %615 = vdwg.mxu0
    %616 = vmatpush.bf16.xpose.msra.mxu0 0
    %617 = vmatpush.bf16.xpose.msra.mxu0 0
    %618 = vmatpush.bf16.xpose.msra.mxu0 0
    %619 = vmatpush.bf16.xpose.msra.mxu0 0
    %620 = vmatpush.bf16.xpose.msra.mxu0 0
    %621 = vmatpush.bf16.xpose.msra.mxu0 0
    %622 = vmatpush.bf16.xpose.msra.mxu0 %v472
    %623 = vmatpush.bf16.xpose.msra.mxu0 %v456
    %624 = vmatmul.bf16.gmra.mxu0 %v328
    %v625 = vpop.f32.mrf.mxu0
    %v626 = vadd.f32 %v613, %v625
    %v627 = vpop.f32.mrf.mxu0
    %628 = vdwg.mxu0
    %629 = vmatpush.bf16.xpose.msra.mxu0 0
    %630 = vmatpush.bf16.xpose.msra.mxu0 0
    %631 = vmatpush.bf16.xpose.msra.mxu0 0
    %632 = vmatpush.bf16.xpose.msra.mxu0 0
    %633 = vmatpush.bf16.xpose.msra.mxu0 0
    %634 = vmatpush.bf16.xpose.msra.mxu0 0
    %635 = vmatpush.bf16.xpose.msra.mxu0 %v473
    %636 = vmatpush.bf16.xpose.msra.mxu0 %v457
    %637 = vmatmul.bf16.gmra.mxu0 %v329
    %v638 = vpop.f32.mrf.mxu0
    %v639 = vadd.f32 %v626, %v638
    %v640 = vpop.f32.mrf.mxu0
    %641 = vdwg.mxu0
    %642 = vmatpush.bf16.xpose.msra.mxu0 0
    %643 = vmatpush.bf16.xpose.msra.mxu0 0
    %644 = vmatpush.bf16.xpose.msra.mxu0 0
    %645 = vmatpush.bf16.xpose.msra.mxu0 0
    %646 = vmatpush.bf16.xpose.msra.mxu0 0
    %647 = vmatpush.bf16.xpose.msra.mxu0 0
    %648 = vmatpush.bf16.xpose.msra.mxu0 %v474
    %649 = vmatpush.bf16.xpose.msra.mxu0 %v458
    %650 = vmatmul.bf16.gmra.mxu0 %v330
    %v651 = vpop.f32.mrf.mxu0
    %v652 = vadd.f32 %v639, %v651
    %v653 = vpop.f32.mrf.mxu0
    %654 = vdwg.mxu0
    %655 = vmatpush.bf16.xpose.msra.mxu0 0
    %656 = vmatpush.bf16.xpose.msra.mxu0 0
    %657 = vmatpush.bf16.xpose.msra.mxu0 0
    %658 = vmatpush.bf16.xpose.msra.mxu0 0
    %659 = vmatpush.bf16.xpose.msra.mxu0 0
    %660 = vmatpush.bf16.xpose.msra.mxu0 0
    %661 = vmatpush.bf16.xpose.msra.mxu0 %v475
    %662 = vmatpush.bf16.xpose.msra.mxu0 %v459
    %663 = vmatmul.bf16.gmra.mxu0 %v331
    %v664 = vpop.f32.mrf.mxu0
    %v665 = vadd.f32 %v652, %v664
    %v666 = vpop.f32.mrf.mxu0
    %667 = vdwg.mxu0
    %668 = vmatpush.bf16.xpose.msra.mxu0 0
    %669 = vmatpush.bf16.xpose.msra.mxu0 0
    %670 = vmatpush.bf16.xpose.msra.mxu0 0
    %671 = vmatpush.bf16.xpose.msra.mxu0 0
    %672 = vmatpush.bf16.xpose.msra.mxu0 0
    %673 = vmatpush.bf16.xpose.msra.mxu0 0
    %674 = vmatpush.bf16.xpose.msra.mxu0 %v476
    %675 = vmatpush.bf16.xpose.msra.mxu0 %v460
    %676 = vmatmul.bf16.gmra.mxu0 %v332
    %v677 = vpop.f32.mrf.mxu0
    %v678 = vadd.f32 %v665, %v677
    %v679 = vpop.f32.mrf.mxu0
    %680 = vdwg.mxu0
    %681 = vmatpush.bf16.xpose.msra.mxu0 0
    %682 = vmatpush.bf16.xpose.msra.mxu0 0
    %683 = vmatpush.bf16.xpose.msra.mxu0 0
    %684 = vmatpush.bf16.xpose.msra.mxu0 0
    %685 = vmatpush.bf16.xpose.msra.mxu0 0
    %686 = vmatpush.bf16.xpose.msra.mxu0 0
    %687 = vmatpush.bf16.xpose.msra.mxu0 %v477
    %688 = vmatpush.bf16.xpose.msra.mxu0 %v461
    %689 = vmatmul.bf16.gmra.mxu0 %v333
    %v690 = vpop.f32.mrf.mxu0
    %v691 = vadd.f32 %v678, %v690
    %v692 = vpop.f32.mrf.mxu0
    %693 = vdwg.mxu0
    %694 = vmatpush.bf16.xpose.msra.mxu0 0
    %695 = vmatpush.bf16.xpose.msra.mxu0 0
    %696 = vmatpush.bf16.xpose.msra.mxu0 0
    %697 = vmatpush.bf16.xpose.msra.mxu0 0
    %698 = vmatpush.bf16.xpose.msra.mxu0 0
    %699 = vmatpush.bf16.xpose.msra.mxu0 0
    %700 = vmatpush.bf16.xpose.msra.mxu0 %v478
    %701 = vmatpush.bf16.xpose.msra.mxu0 %v462
    %702 = vmatmul.bf16.gmra.mxu0 %v334
    %v703 = vpop.f32.mrf.mxu0
    %v704 = vadd.f32 %v691, %v703
    %v705 = vpop.f32.mrf.mxu0
    %706 = vdwg.mxu0
    %707 = vmatpush.bf16.xpose.msra.mxu0 0
    %708 = vmatpush.bf16.xpose.msra.mxu0 0
    %709 = vmatpush.bf16.xpose.msra.mxu0 0
    %710 = vmatpush.bf16.xpose.msra.mxu0 0
    %711 = vmatpush.bf16.xpose.msra.mxu0 0
    %712 = vmatpush.bf16.xpose.msra.mxu0 0
    %713 = vmatpush.bf16.xpose.msra.mxu0 %v479
    %714 = vmatpush.bf16.xpose.msra.mxu0 %v463
    %715 = vmatmul.bf16.gmra.mxu0 %v335
    %v716 = vpop.f32.mrf.mxu0
    %v717 = vadd.f32 %v704, %v716
    %v718 = vpop.f32.mrf.mxu0
    %719 = vdwg.mxu0
    %vm720 = vcmask 261120
    %721 = vst.msk [vmem:[%s6] sm:$0xff] %vm720, %v717
    %v722 = vpack.c.bf16 %v717, %v717
    %v723 = vld [vmem:[#allocation8] sm:$0xff]
    %v724 = vld [vmem:[#allocation8 + $0x8] sm:$0xff]
    %v725 = vld [vmem:[#allocation8 + $0x10] sm:$0xff]
    %v726 = vld [vmem:[#allocation8 + $0x18] sm:$0xff]
    %v727 = vld [vmem:[#allocation8 + $0x20] sm:$0xff]
    %v728 = vld [vmem:[#allocation8 + $0x28] sm:$0xff]
    %v729 = vld [vmem:[#allocation8 + $0x30] sm:$0xff]
    %v730 = vld [vmem:[#allocation8 + $0x38] sm:$0xff]
    %v731 = vld [vmem:[#allocation8 + $0x40] sm:$0xff]
    %v732 = vld [vmem:[#allocation8 + $0x48] sm:$0xff]
    %v733 = vld [vmem:[#allocation8 + $0x50] sm:$0xff]
    %v734 = vld [vmem:[#allocation8 + $0x58] sm:$0xff]
    %v735 = vld [vmem:[#allocation8 + $0x60] sm:$0xff]
    %v736 = vld [vmem:[#allocation8 + $0x68] sm:$0xff]
    %v737 = vld [vmem:[#allocation8 + $0x70] sm:$0xff]
    %v738 = vld [vmem:[#allocation8 + $0x78] sm:$0xff]
    %v739 = vld [vmem:[#allocation10] sm:$0xff]
    %v741 = vperm.slane %v739, 0
    %v742 = vperm.slane %v739, 1
    %v743 = vperm.slane %v739, 2
    %v744 = vperm.slane %v739, 3
    %v745 = vperm.slane %v739, 4
    %v746 = vperm.slane %v739, 5
    %v747 = vperm.slane %v739, 6
    %v748 = vperm.slane %v739, 7
    %v773 = vunpack.c.l.b16 %v723
    %v774 = vunpack.c.h.b16 %v723
    %v775 = vunpack.c.l.b16 %v724
    %v776 = vunpack.c.h.b16 %v724
    %v777 = vunpack.c.l.b16 %v725
    %v778 = vunpack.c.h.b16 %v725
    %v779 = vunpack.c.l.b16 %v726
    %v780 = vunpack.c.h.b16 %v726
    %v781 = vunpack.c.l.b16 %v727
    %v782 = vunpack.c.h.b16 %v727
    %v783 = vunpack.c.l.b16 %v728
    %v784 = vunpack.c.h.b16 %v728
    %v785 = vunpack.c.l.b16 %v729
    %v786 = vunpack.c.h.b16 %v729
    %v787 = vunpack.c.l.b16 %v730
    %v788 = vunpack.c.h.b16 %v730
    %v789 = vunpack.c.l.b16 %v731
    %v790 = vunpack.c.h.b16 %v731
    %v791 = vunpack.c.l.b16 %v732
    %v792 = vunpack.c.h.b16 %v732
    %v793 = vunpack.c.l.b16 %v733
    %v794 = vunpack.c.h.b16 %v733
    %v795 = vunpack.c.l.b16 %v734
    %v796 = vunpack.c.h.b16 %v734
    %v797 = vunpack.c.l.b16 %v735
    %v798 = vunpack.c.h.b16 %v735
    %v799 = vunpack.c.l.b16 %v736
    %v800 = vunpack.c.h.b16 %v736
    %v801 = vunpack.c.l.b16 %v737
    %v802 = vunpack.c.h.b16 %v737
    %v803 = vunpack.c.l.b16 %v738
    %v804 = vunpack.c.h.b16 %v738
    %v805 = vpack.c.b16 %v781, %v773
    %v806 = vpack.c.b16 %v782, %v774
    %v807 = vpack.c.b16 %v783, %v775
    %v808 = vpack.c.b16 %v784, %v776
    %v809 = vpack.c.b16 %v785, %v777
    %v810 = vpack.c.b16 %v786, %v778
    %v811 = vpack.c.b16 %v787, %v779
    %v812 = vpack.c.b16 %v788, %v780
    %v813 = vpack.c.b16 %v797, %v789
    %v814 = vpack.c.b16 %v798, %v790
    %v815 = vpack.c.b16 %v799, %v791
    %v816 = vpack.c.b16 %v800, %v792
    %v817 = vpack.c.b16 %v801, %v793
    %v818 = vpack.c.b16 %v802, %v794
    %v819 = vpack.c.b16 %v803, %v795
    %v820 = vpack.c.b16 %v804, %v796
    %v838 = vsel %vm720, %v722, 0
    %840 = vmatpush.bf16.msra.mxu0 0
    %841 = vmatpush.bf16.msra.mxu0 0
    %842 = vmatpush.bf16.msra.mxu0 0
    %843 = vmatpush.bf16.msra.mxu0 0
    %844 = vmatpush.bf16.msra.mxu0 0
    %845 = vmatpush.bf16.msra.mxu0 0
    %846 = vmatpush.bf16.msra.mxu0 %v813
    %847 = vmatpush.bf16.msra.mxu0 %v805
    %848 = vmatmul.bf16.gmra.mxu0 %v838
    %v849 = vpop.f32.mrf.mxu0
    %v850 = vadd.f32 %v741, %v849
    %v851 = vpop.f32.mrf.mxu0
    %852 = vdwg.mxu0
    %853 = vmatpush.bf16.msra.mxu0 0
    %854 = vmatpush.bf16.msra.mxu0 0
    %855 = vmatpush.bf16.msra.mxu0 0
    %856 = vmatpush.bf16.msra.mxu0 0
    %857 = vmatpush.bf16.msra.mxu0 0
    %858 = vmatpush.bf16.msra.mxu0 0
    %859 = vmatpush.bf16.msra.mxu0 %v814
    %860 = vmatpush.bf16.msra.mxu0 %v806
    %861 = vmatmul.bf16.gmra.mxu0 %v838
    %v862 = vpop.f32.mrf.mxu0
    %v863 = vadd.f32 %v742, %v862
    %v864 = vpop.f32.mrf.mxu0
    %865 = vdwg.mxu0
    %866 = vmatpush.bf16.msra.mxu0 0
    %867 = vmatpush.bf16.msra.mxu0 0
    %868 = vmatpush.bf16.msra.mxu0 0
    %869 = vmatpush.bf16.msra.mxu0 0
    %870 = vmatpush.bf16.msra.mxu0 0
    %871 = vmatpush.bf16.msra.mxu0 0
    %872 = vmatpush.bf16.msra.mxu0 %v815
    %873 = vmatpush.bf16.msra.mxu0 %v807
    %874 = vmatmul.bf16.gmra.mxu0 %v838
    %v875 = vpop.f32.mrf.mxu0
    %v876 = vadd.f32 %v743, %v875
    %v877 = vpop.f32.mrf.mxu0
    %878 = vdwg.mxu0
    %879 = vmatpush.bf16.msra.mxu0 0
    %880 = vmatpush.bf16.msra.mxu0 0
    %881 = vmatpush.bf16.msra.mxu0 0
    %882 = vmatpush.bf16.msra.mxu0 0
    %883 = vmatpush.bf16.msra.mxu0 0
    %884 = vmatpush.bf16.msra.mxu0 0
    %885 = vmatpush.bf16.msra.mxu0 %v816
    %886 = vmatpush.bf16.msra.mxu0 %v808
    %887 = vmatmul.bf16.gmra.mxu0 %v838
    %v888 = vpop.f32.mrf.mxu0
    %v889 = vadd.f32 %v744, %v888
    %v890 = vpop.f32.mrf.mxu0
    %891 = vdwg.mxu0
    %892 = vmatpush.bf16.msra.mxu0 0
    %893 = vmatpush.bf16.msra.mxu0 0
    %894 = vmatpush.bf16.msra.mxu0 0
    %895 = vmatpush.bf16.msra.mxu0 0
    %896 = vmatpush.bf16.msra.mxu0 0
    %897 = vmatpush.bf16.msra.mxu0 0
    %898 = vmatpush.bf16.msra.mxu0 %v817
    %899 = vmatpush.bf16.msra.mxu0 %v809
    %900 = vmatmul.bf16.gmra.mxu0 %v838
    %v901 = vpop.f32.mrf.mxu0
    %v902 = vadd.f32 %v745, %v901
    %v903 = vpop.f32.mrf.mxu0
    %904 = vdwg.mxu0
    %905 = vmatpush.bf16.msra.mxu0 0
    %906 = vmatpush.bf16.msra.mxu0 0
    %907 = vmatpush.bf16.msra.mxu0 0
    %908 = vmatpush.bf16.msra.mxu0 0
    %909 = vmatpush.bf16.msra.mxu0 0
    %910 = vmatpush.bf16.msra.mxu0 0
    %911 = vmatpush.bf16.msra.mxu0 %v818
    %912 = vmatpush.bf16.msra.mxu0 %v810
    %913 = vmatmul.bf16.gmra.mxu0 %v838
    %v914 = vpop.f32.mrf.mxu0
    %v915 = vadd.f32 %v746, %v914
    %v916 = vpop.f32.mrf.mxu0
    %917 = vdwg.mxu0
    %918 = vmatpush.bf16.msra.mxu0 0
    %919 = vmatpush.bf16.msra.mxu0 0
    %920 = vmatpush.bf16.msra.mxu0 0
    %921 = vmatpush.bf16.msra.mxu0 0
    %922 = vmatpush.bf16.msra.mxu0 0
    %923 = vmatpush.bf16.msra.mxu0 0
    %924 = vmatpush.bf16.msra.mxu0 %v819
    %925 = vmatpush.bf16.msra.mxu0 %v811
    %926 = vmatmul.bf16.gmra.mxu0 %v838
    %v927 = vpop.f32.mrf.mxu0
    %v928 = vadd.f32 %v747, %v927
    %v929 = vpop.f32.mrf.mxu0
    %930 = vdwg.mxu0
    %931 = vmatpush.bf16.msra.mxu0 0
    %932 = vmatpush.bf16.msra.mxu0 0
    %933 = vmatpush.bf16.msra.mxu0 0
    %934 = vmatpush.bf16.msra.mxu0 0
    %935 = vmatpush.bf16.msra.mxu0 0
    %936 = vmatpush.bf16.msra.mxu0 0
    %937 = vmatpush.bf16.msra.mxu0 %v820
    %938 = vmatpush.bf16.msra.mxu0 %v812
    %939 = vmatmul.bf16.gmra.mxu0 %v838
    %v940 = vpop.f32.mrf.mxu0
    %v941 = vadd.f32 %v748, %v940
    %v942 = vpop.f32.mrf.mxu0
    %943 = vdwg.mxu0
    %944 = vst [vmem:[%s7] sm:$0xff] %v850
    %945 = vst [vmem:[%s7 + $0x8] sm:$0xff] %v863
    %946 = vst [vmem:[%s7 + $0x10] sm:$0xff] %v876
    %947 = vst [vmem:[%s7 + $0x18] sm:$0xff] %v889
    %948 = vst [vmem:[%s7 + $0x20] sm:$0xff] %v902
    %949 = vst [vmem:[%s7 + $0x28] sm:$0xff] %v915
    %950 = vst [vmem:[%s7 + $0x30] sm:$0xff] %v928
    %951 = vst [vmem:[%s7 + $0x38] sm:$0xff] %v941
    // Predicated region
    $region46: #{_baseline_fc_impl.1} parent=1 // pred_check
      _
    $region47: #{_baseline_fc_impl.1} parent=1 // pred_check_branch
      %953 = sbr.rel (0) target = $region49
    $region48: #{_baseline_fc_impl.1} parent=1 // pred_region
      _
    $region49: #{_baseline_fc_impl.1} parent=1 // pred_fallthru
      _
    // Predicated region
    $region50: #{_baseline_fc_impl.1} parent=1 // pred_check
      _
    $region51: #{_baseline_fc_impl.1} parent=1 // pred_check_branch
      %955 = sbr.rel (0) target = $region53
    $region52: #{_baseline_fc_impl.1} parent=1 // pred_region
      _
    $region53: #{_baseline_fc_impl.1} parent=1 // pred_fallthru
      _
    // Predicated region
    $region54: #{_baseline_fc_impl.1} parent=1 // pred_check
      _
    $region55: #{_baseline_fc_impl.1} parent=1 // pred_check_branch
      %957 = sbr.rel (0) target = $region57
    $region56: #{_baseline_fc_impl.1} parent=1 // pred_region
      _
    $region57: #{_baseline_fc_impl.1} parent=1 // pred_fallthru
      _
    // Predicated region
    $region58: #{_baseline_fc_impl.1} parent=1 // pred_check
      _
    $region59: #{_baseline_fc_impl.1} parent=1 // pred_check_branch
      %959 = sbr.rel (0) target = $region61
    $region60: #{_baseline_fc_impl.1} parent=1 // pred_region
      _
    $region61: #{_baseline_fc_impl.1} parent=1 // pred_fallthru
      _
    %960 = vsyncpa [#allocation4], 1
    %961 = vsyncpa [#allocation6], 1
    %962 = vsyncpa [#allocation9], 1

</llo_original>
